<compile_context>
chip_gen: v7x
topology: tpu7x:2x2x1
jax: 0.10.0
libtpu: 0.0.40
codegen_flags: <defaults>
</compile_context>

<pallas_src>
import functools

import jax
import jax.numpy as jnp
from jax.experimental import pallas as pl
from jax.experimental.pallas import tpu as pltpu

LANE = 128          # TPU lane width; every padded weight block is 128x128.
NUM_BLOCKS = 6      # enc1, enc2, fused(mu|logvar), dec1, dec2, dec3


def _round_up(n, m):
    return ((n + m - 1) // m) * m


def _vae_kernel(x_ref, eps_ref, w_ref, recon_ref, mu_ref, logvar_ref, *,
                input_dim, latent_dim):
    """Fused VAE forward on one batch tile.

    x_ref     : (TB, input_dim)  f32   raw input rows.
    eps_ref   : (TB, latent_dim) f32   N(0,1) noise for reparameterization.
    w_ref     : (768, 128)       bf16  packed weights (bias in row 127 of each
                                       block, blk[127,127] = 1).
    recon_ref : (TB, input_dim)  f32
    mu_ref    : (TB, latent_dim) f32
    logvar_ref: (TB, latent_dim) f32
    """
    cdt = w_ref.dtype          # MXU operand dtype (bf16)
    f32 = jnp.float32

    x = x_ref[...].astype(f32)      # (TB, input_dim)
    eps = eps_ref[...].astype(f32)  # (TB, latent_dim)

    def bias_row(blk):
        # (1, 128) bias row of a block; also carries the constant-1 at lane 127.
        r = (blk + 1) * LANE - 1
        return w_ref[r:r + 1, :].astype(f32)

    def dense_full(v, blk):
        # v is a 128-lane activation whose lane 127 holds the constant 1.0, so
        # the bias (row 127 of the block) folds through the MXU for free.
        w = w_ref[blk * LANE:(blk + 1) * LANE, :]
        return jnp.dot(v.astype(cdt), w, preferred_element_type=f32)

    def dense_narrow(v, blk, k):
        # Narrow (K < 128) input: slice the first K weight rows and add the
        # bias row explicitly (this also seeds lane 127 = 1.0 of the output).
        w = w_ref[blk * LANE:blk * LANE + k, :]
        return jnp.dot(v.astype(cdt), w,
                       preferred_element_type=f32) + bias_row(blk)

    # Encoder: Linear(12,64)+ReLU -> Linear(64,32)+ReLU
    h = jnp.maximum(dense_narrow(x, 0, input_dim), 0.0)   # lanes [0:64], 127=1
    h = jnp.maximum(dense_full(h, 1), 0.0)                # lanes [0:32], 127=1

    # Fused heads: one matmul yields [mu | logvar] in lanes [0 : 2*latent].
    head = dense_full(h, 2)
    mu = head[:, 0:latent_dim]                             # (TB, latent) f32
    logvar = head[:, latent_dim:2 * latent_dim]            # (TB, latent) f32

    # Reparameterize on exact-width slices: no junk lanes, no NaN hazard.
    z = mu + eps * jnp.exp(0.5 * logvar)                   # (TB, latent) f32

    # Decoder: Linear(16,32)+ReLU -> Linear(32,64)+ReLU -> Linear(64,12)
    d = jnp.maximum(dense_narrow(z, 3, latent_dim), 0.0)   # lanes [0:32], 127=1
    d = jnp.maximum(dense_full(d, 4), 0.0)                 # lanes [0:64], 127=1
    recon = dense_full(d, 5)                               # lanes [0:12]

    recon_ref[...] = recon[:, 0:input_dim].astype(recon_ref.dtype)
    mu_ref[...] = mu.astype(mu_ref.dtype)
    logvar_ref[...] = logvar.astype(logvar_ref.dtype)


def init_vae_params(key, input_dim=12, latent_dim=16, dtype=jnp.float32):
    """Deterministic params. Mimics PyTorch Linear default init:
    U(-1/sqrt(fan_in), 1/sqrt(fan_in)).  Weights stored as (in, out)."""
    dims = [
        ("enc1", input_dim, 64),
        ("enc2", 64, 32),
        ("mu", 32, latent_dim),
        ("logvar", 32, latent_dim),
        ("dec1", latent_dim, 32),
        ("dec2", 32, 64),
        ("dec3", 64, input_dim),
    ]
    params = {}
    for name, fan_in, fan_out in dims:
        key, kw, kb = jax.random.split(key, 3)
        bound = 1.0 / jnp.sqrt(float(fan_in))
        params[name + "_w"] = jax.random.uniform(
            kw, (fan_in, fan_out), dtype, minval=-bound, maxval=bound)
        params[name + "_b"] = jax.random.uniform(
            kb, (1, fan_out), dtype, minval=-bound, maxval=bound)
    return params


def pack_vae_params(params, *, input_dim=12, latent_dim=16,
                    param_dtype=jnp.bfloat16):
    """Pack all weights+biases into one (6*128, 128) buffer.

    Per 128x128 block: [0:fan_in, 0:fan_out] holds W ((in, out) layout),
    row 127 cols [0:fan_out] holds the bias, and blk[127,127] = 1 propagates
    the constant-1 bias lane through every layer.  mu/logvar are fused into
    one (32, 2*latent) block."""
    assert input_dim <= LANE - 1 and 2 * latent_dim <= LANE - 1
    layers = [
        (params["enc1_w"], params["enc1_b"]),
        (params["enc2_w"], params["enc2_b"]),
        (jnp.concatenate([params["mu_w"], params["logvar_w"]], axis=1),
         jnp.concatenate([params["mu_b"], params["logvar_b"]], axis=1)),
        (params["dec1_w"], params["dec1_b"]),
        (params["dec2_w"], params["dec2_b"]),
        (params["dec3_w"], params["dec3_b"]),
    ]
    blocks = []
    for w, b in layers:
        fan_in, fan_out = w.shape
        assert fan_in <= LANE - 1 and fan_out <= LANE - 1
        blk = jnp.zeros((LANE, LANE), jnp.float32)
        blk = blk.at[:fan_in, :fan_out].set(w.astype(jnp.float32))
        blk = blk.at[LANE - 1, :fan_out].set(b.reshape(-1).astype(jnp.float32))
        blk = blk.at[LANE - 1, LANE - 1].set(1.0)
        blocks.append(blk)
    return jnp.concatenate(blocks, axis=0).astype(param_dtype)


@functools.partial(jax.jit,
                   static_argnames=("input_dim", "latent_dim", "block_rows"))
def vae_forward(x, eps, packed_params, *, input_dim=12, latent_dim=16,
                block_rows=4096):
    batch = x.shape[0]
    batch8 = _round_up(batch, 8)

    # Near-equal 8-aligned batch tiles: bounds padding waste, and >=2 grid
    # steps whenever the batch allows it so both v7x TensorCores get work.
    n_steps = pl.cdiv(batch8, block_rows)
    if batch8 >= 16:
        n_steps = max(n_steps, 2)
    tb = _round_up(pl.cdiv(batch8, n_steps), 8)
    batch_pad = n_steps * tb

    if batch_pad != batch:
        pad = batch_pad - batch
        x = jnp.pad(x, ((0, pad), (0, 0)))
        eps = jnp.pad(eps, ((0, pad), (0, 0)))

    in_row_bytes = (input_dim * jnp.dtype(x.dtype).itemsize
                    + latent_dim * jnp.dtype(eps.dtype).itemsize)
    out_row_bytes = (input_dim + 2 * latent_dim) * 4
    param_bytes = packed_params.size * jnp.dtype(packed_params.dtype).itemsize

    # Explicit VMEM budget: params (constant index_map, counted x2 to be safe)
    # + double-buffered in/out tiles + generous headroom for f32 intermediates.
    vmem_est = (2 * param_bytes
                + 2 * tb * (in_row_bytes + out_row_bytes)
                + 8 * tb * LANE * 4
                + (2 << 20))
    vmem_limit = int(min(max(vmem_est, 16 << 20), 48 << 20))

    layer_dims = ((input_dim, 64), (64, 32), (32, 2 * latent_dim),
                  (latent_dim, 32), (32, 64), (64, input_dim))
    flops = 2 * batch_pad * sum(i * o for i, o in layer_dims)
    bytes_accessed = (batch_pad * (in_row_bytes + out_row_bytes) + param_bytes)

    recon, mu, logvar = pl.pallas_call(
        functools.partial(_vae_kernel, input_dim=input_dim,
                          latent_dim=latent_dim),
        out_shape=(
            jax.ShapeDtypeStruct((batch_pad, input_dim), jnp.float32),
            jax.ShapeDtypeStruct((batch_pad, latent_dim), jnp.float32),
            jax.ShapeDtypeStruct((batch_pad, latent_dim), jnp.float32),
        ),
        grid=(n_steps,),
        in_specs=[
            pl.BlockSpec((tb, input_dim), lambda i: (i, 0)),
            pl.BlockSpec((tb, latent_dim), lambda i: (i, 0)),
            # Constant index_map: packed params stay VMEM-resident across steps.
            pl.BlockSpec((NUM_BLOCKS * LANE, LANE), lambda i: (0, 0)),
        ],
        out_specs=(
            pl.BlockSpec((tb, input_dim), lambda i: (i, 0)),
            pl.BlockSpec((tb, latent_dim), lambda i: (i, 0)),
            pl.BlockSpec((tb, latent_dim), lambda i: (i, 0)),
        ),
        compiler_params=pltpu.CompilerParams(
            dimension_semantics=("parallel",),
            vmem_limit_bytes=vmem_limit),
        cost_estimate=pl.CostEstimate(
            flops=flops,
            transcendentals=batch_pad * latent_dim,
            bytes_accessed=bytes_accessed),
    )(x, eps, packed_params)

    if batch_pad != batch:
        recon, mu, logvar = recon[:batch], mu[:batch], logvar[:batch]
    return recon, mu, logvar


def vae_forward_ref(x, eps, params, param_dtype=jnp.bfloat16):
    """Pure-JAX reference mirroring the kernel's dtype behavior
    (bf16 MXU operands, f32 accumulation, f32 elementwise math)."""
    def lin(v, w, b):
        acc = jnp.dot(v.astype(param_dtype), w.astype(param_dtype),
                      preferred_element_type=jnp.float32)
        return acc + b.astype(param_dtype).astype(jnp.float32)
    relu = lambda v: jnp.maximum(v, 0.0)
    h = relu(lin(x, params["enc1_w"], params["enc1_b"]))
    h = relu(lin(h, params["enc2_w"], params["enc2_b"]))
    mu = lin(h, params["mu_w"], params["mu_b"])
    logvar = lin(h, params["logvar_w"], params["logvar_b"])
    z = mu + eps * jnp.exp(0.5 * logvar)
    d = relu(lin(z, params["dec1_w"], params["dec1_b"]))
    d = relu(lin(d, params["dec2_w"], params["dec2_b"]))
    recon = lin(d, params["dec3_w"], params["dec3_b"])
    return recon, mu, logvar


if __name__ == "__main__":
    INPUT_DIM = 12
    LATENT_DIM = 16
    BATCH = 8

    key = jax.random.PRNGKey(0)
    k_params, k_x, k_eps = jax.random.split(key, 3)

    params = init_vae_params(k_params, INPUT_DIM, LATENT_DIM)
    packed = pack_vae_params(params, input_dim=INPUT_DIM,
                             latent_dim=LATENT_DIM,
                             param_dtype=jnp.bfloat16)

    x = jax.random.normal(k_x, (BATCH, INPUT_DIM), jnp.float32)
    # TODO(synk): torch.randn_like lives outside the kernel; eps is passed in
    # explicitly so the Pallas forward is deterministic.
    eps = jax.random.normal(k_eps, (BATCH, LATENT_DIM), jnp.float32)

    recon, mu, logvar = vae_forward(x, eps, packed,
                                    input_dim=INPUT_DIM,
                                    latent_dim=LATENT_DIM)
    jax.block_until_ready((recon, mu, logvar))

    # Sanity check against a pure-JAX reference with matching bf16 weights.
    r_ref, mu_ref, lv_ref = vae_forward_ref(x, eps, params, jnp.bfloat16)
    assert recon.shape == (BATCH, INPUT_DIM)
    assert mu.shape == (BATCH, LATENT_DIM)
    assert logvar.shape == (BATCH, LATENT_DIM)
    assert jnp.allclose(mu, mu_ref, atol=2e-2, rtol=2e-2)
    assert jnp.allclose(logvar, lv_ref, atol=2e-2, rtol=2e-2)
    assert jnp.allclose(recon, r_ref, atol=2e-2, rtol=2e-2)

    print("KERNEL_OK")
</pallas_src>

<mosaic_0001>
module attributes {stable_mosaic.version = 11 : i64} {
  func.func @_vae_kernel(%arg0: i32, %arg1: memref<8x12xf32, #tpu.memory_space<vmem>>, %arg2: memref<8x16xf32, #tpu.memory_space<vmem>>, %arg3: memref<768x128xbf16, #tpu.memory_space<vmem>>, %arg4: memref<8x12xf32, #tpu.memory_space<vmem>>, %arg5: memref<8x16xf32, #tpu.memory_space<vmem>>, %arg6: memref<8x16xf32, #tpu.memory_space<vmem>>) attributes {dimension_semantics = [#tpu.dimension_semantics<parallel>], iteration_bounds = array<i64: 1>, scalar_prefetch = 0 : i64, scratch_operands = 0 : i64, tpu.core_type = #tpu.core_type<tc>, window_params = [{transform_indices = @transform_0, window_bounds = array<i64: 8, 12>}, {transform_indices = @transform_1, window_bounds = array<i64: 8, 16>}, {pipeline_mode = #tpu.pipeline_mode<synchronous>, transform_indices = @transform_2, window_bounds = array<i64: 768, 128>}, {transform_indices = @transform_3, window_bounds = array<i64: 8, 12>}, {transform_indices = @transform_4, window_bounds = array<i64: 8, 16>}, {transform_indices = @transform_5, window_bounds = array<i64: 8, 16>}]} {
    %c0 = arith.constant 0 : index
    %c0_0 = arith.constant 0 : index
    %0 = vector.load %arg1[%c0, %c0_0] : memref<8x12xf32, #tpu.memory_space<vmem>>, vector<8x12xf32>
    %c0_1 = arith.constant 0 : index
    %c0_2 = arith.constant 0 : index
    %1 = vector.load %arg2[%c0_1, %c0_2] : memref<8x16xf32, #tpu.memory_space<vmem>>, vector<8x16xf32>
    %c0_3 = arith.constant 0 : index
    %c0_4 = arith.constant 0 : index
    %2 = vector.load %arg3[%c0_3, %c0_4] : memref<768x128xbf16, #tpu.memory_space<vmem>>, vector<12x128xbf16>
    %3 = arith.truncf %0 : vector<8x12xf32> to vector<8x12xbf16>
    %cst = arith.constant dense<0.000000e+00> : vector<8x128xf32>
    %4 = tpu.matmul %3, %2, %cst {dimension_numbers = #tpu.dot_dimension_numbers<[1], [0], [0], [1], [0, 0, 1, 1], [], []>} : vector<8x12xbf16>, vector<12x128xbf16>, vector<8x128xf32> -> vector<8x128xf32>
    %c127 = arith.constant 127 : index
    %c0_5 = arith.constant 0 : index
    %5 = vector.load %arg3[%c127, %c0_5] : memref<768x128xbf16, #tpu.memory_space<vmem>>, vector<1x128xbf16>
    %6 = arith.extf %5 : vector<1x128xbf16> to vector<1x128xf32>
    %7 = vector.broadcast %6 : vector<1x128xf32> to vector<8x128xf32>
    %8 = arith.addf %4, %7 : vector<8x128xf32>
    %cst_6 = arith.constant 0.000000e+00 : f32
    %9 = vector.broadcast %cst_6 : f32 to vector<8x128xf32>
    %10 = arith.maximumf %8, %9 : vector<8x128xf32>
    %c128 = arith.constant 128 : index
    %c0_7 = arith.constant 0 : index
    %11 = vector.load %arg3[%c128, %c0_7] : memref<768x128xbf16, #tpu.memory_space<vmem>>, vector<128x128xbf16>
    %12 = arith.truncf %10 : vector<8x128xf32> to vector<8x128xbf16>
    %cst_8 = arith.constant dense<0.000000e+00> : vector<8x128xf32>
    %13 = tpu.matmul %12, %11, %cst_8 {dimension_numbers = #tpu.dot_dimension_numbers<[1], [0], [0], [1], [0, 0, 1, 1], [], []>} : vector<8x128xbf16>, vector<128x128xbf16>, vector<8x128xf32> -> vector<8x128xf32>
    %cst_9 = arith.constant 0.000000e+00 : f32
    %14 = vector.broadcast %cst_9 : f32 to vector<8x128xf32>
    %15 = arith.maximumf %13, %14 : vector<8x128xf32>
    %c256 = arith.constant 256 : index
    %c0_10 = arith.constant 0 : index
    %16 = vector.load %arg3[%c256, %c0_10] : memref<768x128xbf16, #tpu.memory_space<vmem>>, vector<128x128xbf16>
    %17 = arith.truncf %15 : vector<8x128xf32> to vector<8x128xbf16>
    %cst_11 = arith.constant dense<0.000000e+00> : vector<8x128xf32>
    %18 = tpu.matmul %17, %16, %cst_11 {dimension_numbers = #tpu.dot_dimension_numbers<[1], [0], [0], [1], [0, 0, 1, 1], [], []>} : vector<8x128xbf16>, vector<128x128xbf16>, vector<8x128xf32> -> vector<8x128xf32>
    %19 = vector.extract_strided_slice %18 {offsets = [0, 0], sizes = [8, 16], strides = [1, 1]} : vector<8x128xf32> to vector<8x16xf32>
    %20 = vector.extract_strided_slice %18 {offsets = [0, 16], sizes = [8, 16], strides = [1, 1]} : vector<8x128xf32> to vector<8x16xf32>
    %cst_12 = arith.constant 5.000000e-01 : f32
    %21 = vector.broadcast %cst_12 : f32 to vector<8x16xf32>
    %22 = arith.mulf %21, %20 : vector<8x16xf32>
    %23 = math.exp %22 : vector<8x16xf32>
    %24 = arith.mulf %1, %23 : vector<8x16xf32>
    %25 = arith.addf %19, %24 : vector<8x16xf32>
    %c384 = arith.constant 384 : index
    %c0_13 = arith.constant 0 : index
    %26 = vector.load %arg3[%c384, %c0_13] : memref<768x128xbf16, #tpu.memory_space<vmem>>, vector<16x128xbf16>
    %27 = arith.truncf %25 : vector<8x16xf32> to vector<8x16xbf16>
    %cst_14 = arith.constant dense<0.000000e+00> : vector<8x128xf32>
    %28 = tpu.matmul %27, %26, %cst_14 {dimension_numbers = #tpu.dot_dimension_numbers<[1], [0], [0], [1], [0, 0, 1, 1], [], []>} : vector<8x16xbf16>, vector<16x128xbf16>, vector<8x128xf32> -> vector<8x128xf32>
    %c511 = arith.constant 511 : index
    %c0_15 = arith.constant 0 : index
    %29 = vector.load %arg3[%c511, %c0_15] : memref<768x128xbf16, #tpu.memory_space<vmem>>, vector<1x128xbf16>
    %30 = arith.extf %29 : vector<1x128xbf16> to vector<1x128xf32>
    %31 = vector.broadcast %30 : vector<1x128xf32> to vector<8x128xf32>
    %32 = arith.addf %28, %31 : vector<8x128xf32>
    %cst_16 = arith.constant 0.000000e+00 : f32
    %33 = vector.broadcast %cst_16 : f32 to vector<8x128xf32>
    %34 = arith.maximumf %32, %33 : vector<8x128xf32>
    %c512 = arith.constant 512 : index
    %c0_17 = arith.constant 0 : index
    %35 = vector.load %arg3[%c512, %c0_17] : memref<768x128xbf16, #tpu.memory_space<vmem>>, vector<128x128xbf16>
    %36 = arith.truncf %34 : vector<8x128xf32> to vector<8x128xbf16>
    %cst_18 = arith.constant dense<0.000000e+00> : vector<8x128xf32>
    %37 = tpu.matmul %36, %35, %cst_18 {dimension_numbers = #tpu.dot_dimension_numbers<[1], [0], [0], [1], [0, 0, 1, 1], [], []>} : vector<8x128xbf16>, vector<128x128xbf16>, vector<8x128xf32> -> vector<8x128xf32>
    %cst_19 = arith.constant 0.000000e+00 : f32
    %38 = vector.broadcast %cst_19 : f32 to vector<8x128xf32>
    %39 = arith.maximumf %37, %38 : vector<8x128xf32>
    %c640 = arith.constant 640 : index
    %c0_20 = arith.constant 0 : index
    %40 = vector.load %arg3[%c640, %c0_20] : memref<768x128xbf16, #tpu.memory_space<vmem>>, vector<128x128xbf16>
    %41 = arith.truncf %39 : vector<8x128xf32> to vector<8x128xbf16>
    %cst_21 = arith.constant dense<0.000000e+00> : vector<8x128xf32>
    %42 = tpu.matmul %41, %40, %cst_21 {dimension_numbers = #tpu.dot_dimension_numbers<[1], [0], [0], [1], [0, 0, 1, 1], [], []>} : vector<8x128xbf16>, vector<128x128xbf16>, vector<8x128xf32> -> vector<8x128xf32>
    %43 = vector.extract_strided_slice %42 {offsets = [0, 0], sizes = [8, 12], strides = [1, 1]} : vector<8x128xf32> to vector<8x12xf32>
    %c0_22 = arith.constant 0 : index
    %c0_23 = arith.constant 0 : index
    %44 = vector.load %arg4[%c0_22, %c0_23] : memref<8x12xf32, #tpu.memory_space<vmem>>, vector<8x12xf32>
    tpu.vector_store %arg4[%c0_22, %c0_23], %43 {strides = array<i32>} : memref<8x12xf32, #tpu.memory_space<vmem>>, vector<8x12xf32>,
    %c0_24 = arith.constant 0 : index
    %c0_25 = arith.constant 0 : index
    %45 = vector.load %arg5[%c0_24, %c0_25] : memref<8x16xf32, #tpu.memory_space<vmem>>, vector<8x16xf32>
    tpu.vector_store %arg5[%c0_24, %c0_25], %19 {strides = array<i32>} : memref<8x16xf32, #tpu.memory_space<vmem>>, vector<8x16xf32>,
    %c0_26 = arith.constant 0 : index
    %c0_27 = arith.constant 0 : index
    %46 = vector.load %arg6[%c0_26, %c0_27] : memref<8x16xf32, #tpu.memory_space<vmem>>, vector<8x16xf32>
    tpu.vector_store %arg6[%c0_26, %c0_27], %20 {strides = array<i32>} : memref<8x16xf32, #tpu.memory_space<vmem>>, vector<8x16xf32>,
    return
  }
  func.func @transform_0(%arg0: i32) -> (i32, i32) {
    %c0_i32 = arith.constant 0 : i32
    %c0_i32_0 = arith.constant 0 : i32
    return %arg0, %c0_i32 : i32, i32
  }
  func.func @transform_1(%arg0: i32) -> (i32, i32) {
    %c0_i32 = arith.constant 0 : i32
    %c0_i32_0 = arith.constant 0 : i32
    return %arg0, %c0_i32 : i32, i32
  }
  func.func @transform_2(%arg0: i32) -> (i32, i32) {
    %c0_i32 = arith.constant 0 : i32
    %c0_i32_0 = arith.constant 0 : i32
    %c0_i32_1 = arith.constant 0 : i32
    return %c0_i32, %c0_i32_0 : i32, i32
  }
  func.func @transform_3(%arg0: i32) -> (i32, i32) {
    %c0_i32 = arith.constant 0 : i32
    %c0_i32_0 = arith.constant 0 : i32
    return %arg0, %c0_i32 : i32, i32
  }
  func.func @transform_4(%arg0: i32) -> (i32, i32) {
    %c0_i32 = arith.constant 0 : i32
    %c0_i32_0 = arith.constant 0 : i32
    return %arg0, %c0_i32 : i32, i32
  }
  func.func @transform_5(%arg0: i32) -> (i32, i32) {
    %c0_i32 = arith.constant 0 : i32
    %c0_i32_0 = arith.constant 0 : i32
    return %arg0, %c0_i32 : i32, i32
  }
}

</mosaic_0001>

<llo_original>
// kernel: vae_forward.1
$region0: #{vae_forward.1}
  #allocation0 [shape = 'u32[]', space=smem, size = 0x4, offset = 0x4, fixed_abs, tag = 'smem constant byte address 0x4 - core index']
  #allocation1 [shape = 'u32[144,128]{1,0:T(1,128)}', space=vmem, size = 0x12000, scoped, tag = 'internal scratch']
  %s0 = inlined_call_operand.hbm [shape: f32[8,12], index: 0, kind: input, shape index: {}]
  %s1 = inlined_call_operand.hbm [shape: f32[8,16], index: 1, kind: input, shape index: {}]
  %s2 = inlined_call_operand.hbm [shape: bf16[768,128], index: 2, kind: input, shape index: {}]
  %s3 = inlined_call_operand.hbm [shape: f32[8,12], index: 3, kind: output, shape index: {0}]
  %s4 = inlined_call_operand.hbm [shape: f32[8,16], index: 4, kind: output, shape index: {1}]
  %s5 = inlined_call_operand.hbm [shape: f32[8,16], index: 5, kind: output, shape index: {2}]
  %6 = xla_tuple %s3, %s4, %s5
  %s7 = sld [smem:[#allocation0]]
  $region50: #{vae_forward.1} parent=0
    _
  %s9 = ssub.s32 1, %s7
  %s10 = scalar_select 0, %s9, %s7
  $region1: #{vae_forward.1} parent=0
    #allocation2 [shape = 'u8[4096]{0}', space=vmem, size = 0x1000, scoped, tag = 'input window, operand 0, single buffered']
    #allocation3 [shape = 's32[1]{0}', space=sflag, size = 0x4, scoped, tag = 'scoped memory for vae_forward.1']
    #allocation4 [shape = 's32[1]{0}', space=sflag, size = 0x4, scoped, tag = 'scoped memory for vae_forward.1']
    #allocation5 [shape = 'u8[4096]{0}', space=vmem, size = 0x1000, scoped, tag = 'input window, operand 1, single buffered']
    #allocation6 [shape = 's32[1]{0}', space=sflag, size = 0x4, scoped, tag = 'scoped memory for vae_forward.1']
    #allocation7 [shape = 'u8[196608]{0}', space=vmem, size = 0x30000, scoped, tag = 'input window, operand 2, single buffered']
    #allocation8 [shape = 'u8[4096]{0}', space=vmem, size = 0x1000, scoped, tag = 'output window, operand 0, single buffered']
    #allocation9 [shape = 'u8[4096]{0}', space=vmem, size = 0x1000, scoped, tag = 'output window, operand 1, single buffered']
    #allocation10 [shape = 's32[1]{0}', space=sflag, size = 0x4, scoped, tag = 'scoped memory for vae_forward.1']
    #allocation11 [shape = 'u8[4096]{0}', space=vmem, size = 0x1000, scoped, tag = 'output window, operand 2, single buffered']
    %11 = vsyncpa [#allocation3], 0
    %12 = vsyncpa [#allocation6], 0
    %13 = vsyncpa [#allocation4], 0
    %14 = vsyncpa [#allocation10], 0
    // Predicated region
    $region2: #{vae_forward.1} parent=1 // pred_check
      _
    $region3: #{vae_forward.1} parent=1 // pred_check_branch
      %16 = sbr.rel (0) target = $region5
    $region4: #{vae_forward.1} parent=1 // pred_region
      %s18 = ssub.s32 128, 128
      %19 = vsyncadd [#allocation3], %s18
      %s21 = sshll.u32 [#allocation2], 4
      %s22 = int_to_ptr.vmem [resolvable:$true] %s21
      %24 = dma.hbm_to_vmem [thread:$0]  %s0, 128, %s22, [#allocation3]
    $region5: #{vae_forward.1} parent=1 // pred_fallthru
      _
    // Predicated region
    $region6: #{vae_forward.1} parent=1 // pred_check
      _
    $region7: #{vae_forward.1} parent=1 // pred_check_branch
      %26 = sbr.rel (0) target = $region9
    $region8: #{vae_forward.1} parent=1 // pred_region
      %s28 = ssub.s32 128, 128
      %29 = vsyncadd [#allocation6], %s28
      %s31 = sshll.u32 [#allocation5], 4
      %s32 = int_to_ptr.vmem [resolvable:$true] %s31
      %34 = dma.hbm_to_vmem [thread:$0]  %s1, 128, %s32, [#allocation6]
    $region9: #{vae_forward.1} parent=1 // pred_fallthru
      _
    // Predicated region
    $region10: #{vae_forward.1} parent=1 // pred_check
      _
    $region11: #{vae_forward.1} parent=1 // pred_check_branch
      %36 = sbr.rel (0) target = $region13
    $region12: #{vae_forward.1} parent=1 // pred_region
      %s38 = ssub.s32 6144, 6144
      %39 = vsyncadd [#allocation6], %s38
      %s40 = sshll.u32 [#allocation7], 4
      %s41 = int_to_ptr.vmem [resolvable:$true] %s40
      %46 = dma.hbm_to_vmem [thread:$0]  %s2, 6144, %s41, [#allocation6], 64, 64, 4
    $region13: #{vae_forward.1} parent=1 // pred_fallthru
      _
    // Predicated region
    $region14: #{vae_forward.1} parent=1 // pred_check
      _
    $region15: #{vae_forward.1} parent=1 // pred_check_branch
      %48 = sbr.rel (0) target = $region17
    $region16: #{vae_forward.1} parent=1 // pred_region
      %49 = dma.done [#allocation3], 128
    $region17: #{vae_forward.1} parent=1 // pred_fallthru
      _
    // Predicated region
    $region18: #{vae_forward.1} parent=1 // pred_check
      _
    $region19: #{vae_forward.1} parent=1 // pred_check_branch
      %51 = sbr.rel (0) target = $region21
    $region20: #{vae_forward.1} parent=1 // pred_region
      %52 = dma.done [#allocation6], 128
    $region21: #{vae_forward.1} parent=1 // pred_fallthru
      _
    // Predicated region
    $region22: #{vae_forward.1} parent=1 // pred_check
      _
    $region23: #{vae_forward.1} parent=1 // pred_check_branch
      %54 = sbr.rel (0) target = $region25
    $region24: #{vae_forward.1} parent=1 // pred_region
      %55 = dma.done [#allocation6], 6144
    $region25: #{vae_forward.1} parent=1 // pred_fallthru
      _
    %v57 = vld [vmem:[#allocation2] sm:$0xff]
    %v58 = vld [vmem:[#allocation5] sm:$0xff]
    %v59 = vld [vmem:[#allocation7] sm:$0xf]
    %v60 = vld [vmem:[#allocation7 + $0x4] sm:$0x3]
    %v61 = vpack.c.bf16 %v57, %v57
    %v62 = vld [vmem:[#allocation7 + $0x3c] sm:$0x8]
    %v63 = vunpack.c.l.bf16 %v62
    %v64 = vlaneseq
    %v65 = vshrl.u32 %v64, 7
    %v66 = vsub.s32 7, %v65
    %v67 = vrot.slane %v63, %v66
    %v70 = vunpack.c.l.b16 %v59
    %v71 = vunpack.c.l.b16 %v60
    %v72 = vpack.c.b16 %v71, %v70
    %vm73 = vcmask 97280
    %v75 = vsel %vm73, %v61, 0
    %vm77 = vcmask 1045504
    %v79 = vsel %vm77, %v72, 0
    %81 = vmatprep.subr.bf16.mxu0 0
    %82 = vmatpush1.bf16.msra.mxu0 %v79
    %83 = vmatprep.subr.bf16.mxu0 0
    %84 = vmatpush1.bf16.msra.mxu0 0
    %85 = vmatprep.subr.bf16.mxu0 0
    %86 = vmatpush1.bf16.msra.mxu0 0
    %87 = vmatprep.subr.bf16.mxu0 0
    %88 = vmatpush1.bf16.msra.mxu0 0
    %89 = vmatprep.subr.bf16.mxu0 0
    %90 = vmatpush1.bf16.msra.mxu0 0
    %91 = vmatprep.subr.bf16.mxu0 0
    %92 = vmatpush1.bf16.msra.mxu0 0
    %93 = vmatprep.subr.bf16.mxu0 0
    %94 = vmatpush1.bf16.msra.mxu0 0
    %95 = vmatprep.subr.bf16.mxu0 0
    %96 = vmatpush1.bf16.msra.mxu0 0
    %97 = vmatprep.subr.bf16.mxu0 0
    %98 = vmatpush1.bf16.msra.mxu0 0
    %99 = vmatprep.subr.bf16.mxu0 0
    %100 = vmatpush1.bf16.msra.mxu0 0
    %101 = vmatprep.subr.bf16.mxu0 0
    %102 = vmatpush1.bf16.msra.mxu0 0
    %103 = vmatprep.subr.bf16.mxu0 0
    %104 = vmatpush1.bf16.msra.mxu0 0
    %105 = vmatprep.subr.bf16.mxu0 0
    %106 = vmatpush1.bf16.msra.mxu0 0
    %107 = vmatprep.subr.bf16.mxu0 0
    %108 = vmatpush1.bf16.msra.mxu0 0
    %109 = vmatprep.subr.bf16.mxu0 0
    %110 = vmatpush1.bf16.msra.mxu0 0
    %111 = vmatprep.subr.bf16.mxu0 0
    %112 = vmatpush1.bf16.msra.mxu0 0
    %113 = vmatprep.mubr.bf16.mxu0 0
    %114 = vmatmul.mubr.bf16.gmra.mrb[0].mxu0 %v75
    %v115 = vpop.f32.mrb[0].mxu0
    %v116 = vadd.f32 %v67, %v115
    %v117 = vpop.f32.mrb[0].mxu0
    %v118 = vpop.f32.mrb[0].mxu0
    %v119 = vpop.f32.mrb[0].mxu0
    %120 = vdwg.mxu0
    %v121 = vmax.f32 %v116, 0.0
    %v122 = vld [vmem:[#allocation7 + $0x40] sm:$0xf]
    %v123 = vld [vmem:[#allocation7 + $0x44] sm:$0xf]
    %v124 = vld [vmem:[#allocation7 + $0x48] sm:$0xf]
    %v125 = vld [vmem:[#allocation7 + $0x4c] sm:$0xf]
    %v126 = vld [vmem:[#allocation7 + $0x50] sm:$0xf]
    %v127 = vld [vmem:[#allocation7 + $0x54] sm:$0xf]
    %v128 = vld [vmem:[#allocation7 + $0x58] sm:$0xf]
    %v129 = vld [vmem:[#allocation7 + $0x5c] sm:$0xf]
    %v130 = vld [vmem:[#allocation7 + $0x60] sm:$0xf]
    %v131 = vld [vmem:[#allocation7 + $0x64] sm:$0xf]
    %v132 = vld [vmem:[#allocation7 + $0x68] sm:$0xf]
    %v133 = vld [vmem:[#allocation7 + $0x6c] sm:$0xf]
    %v134 = vld [vmem:[#allocation7 + $0x70] sm:$0xf]
    %v135 = vld [vmem:[#allocation7 + $0x74] sm:$0xf]
    %v136 = vld [vmem:[#allocation7 + $0x78] sm:$0xf]
    %v137 = vld [vmem:[#allocation7 + $0x7c] sm:$0xf]
    %v138 = vpack.c.bf16 %v121, %v121
    %v155 = vunpack.c.l.b16 %v122
    %v156 = vunpack.c.l.b16 %v123
    %v157 = vunpack.c.l.b16 %v124
    %v158 = vunpack.c.l.b16 %v125
    %v159 = vunpack.c.l.b16 %v126
    %v160 = vunpack.c.l.b16 %v127
    %v161 = vunpack.c.l.b16 %v128
    %v162 = vunpack.c.l.b16 %v129
    %v163 = vunpack.c.l.b16 %v130
    %v164 = vunpack.c.l.b16 %v131
    %v165 = vunpack.c.l.b16 %v132
    %v166 = vunpack.c.l.b16 %v133
    %v167 = vunpack.c.l.b16 %v134
    %v168 = vunpack.c.l.b16 %v135
    %v169 = vunpack.c.l.b16 %v136
    %v170 = vunpack.c.l.b16 %v137
    %v171 = vpack.c.b16 %v156, %v155
    %v172 = vpack.c.b16 %v158, %v157
    %v173 = vpack.c.b16 %v160, %v159
    %v174 = vpack.c.b16 %v162, %v161
    %v175 = vpack.c.b16 %v164, %v163
    %v176 = vpack.c.b16 %v166, %v165
    %v177 = vpack.c.b16 %v168, %v167
    %v178 = vpack.c.b16 %v170, %v169
    %187 = vmatprep.subr.bf16.mxu0 0
    %188 = vmatpush1.bf16.msra.mxu0 %v171
    %189 = vmatprep.subr.bf16.mxu0 0
    %190 = vmatpush1.bf16.msra.mxu0 %v172
    %191 = vmatprep.subr.bf16.mxu0 0
    %192 = vmatpush1.bf16.msra.mxu0 %v173
    %193 = vmatprep.subr.bf16.mxu0 0
    %194 = vmatpush1.bf16.msra.mxu0 %v174
    %195 = vmatprep.subr.bf16.mxu0 0
    %196 = vmatpush1.bf16.msra.mxu0 %v175
    %197 = vmatprep.subr.bf16.mxu0 0
    %198 = vmatpush1.bf16.msra.mxu0 %v176
    %199 = vmatprep.subr.bf16.mxu0 0
    %200 = vmatpush1.bf16.msra.mxu0 %v177
    %201 = vmatprep.subr.bf16.mxu0 0
    %202 = vmatpush1.bf16.msra.mxu0 %v178
    %203 = vmatprep.subr.bf16.mxu0 0
    %204 = vmatpush1.bf16.msra.mxu0 0
    %205 = vmatprep.subr.bf16.mxu0 0
    %206 = vmatpush1.bf16.msra.mxu0 0
    %207 = vmatprep.subr.bf16.mxu0 0
    %208 = vmatpush1.bf16.msra.mxu0 0
    %209 = vmatprep.subr.bf16.mxu0 0
    %210 = vmatpush1.bf16.msra.mxu0 0
    %211 = vmatprep.subr.bf16.mxu0 0
    %212 = vmatpush1.bf16.msra.mxu0 0
    %213 = vmatprep.subr.bf16.mxu0 0
    %214 = vmatpush1.bf16.msra.mxu0 0
    %215 = vmatprep.subr.bf16.mxu0 0
    %216 = vmatpush1.bf16.msra.mxu0 0
    %217 = vmatprep.subr.bf16.mxu0 0
    %218 = vmatpush1.bf16.msra.mxu0 0
    %219 = vmatprep.mubr.bf16.mxu0 0
    %220 = vmatmul.mubr.bf16.gmra.mrb[0].mxu0 %v138
    %v221 = vpop.f32.mrb[0].mxu0
    %v222 = vadd.f32 0.0, %v221
    %v223 = vpop.f32.mrb[0].mxu0
    %v224 = vpop.f32.mrb[0].mxu0
    %v225 = vpop.f32.mrb[0].mxu0
    %226 = vdwg.mxu0
    %v227 = vmax.f32 %v222, 0.0
    %v228 = vld [vmem:[#allocation7 + $0x80] sm:$0xf]
    %v229 = vld [vmem:[#allocation7 + $0x84] sm:$0xf]
    %v230 = vld [vmem:[#allocation7 + $0x88] sm:$0xf]
    %v231 = vld [vmem:[#allocation7 + $0x8c] sm:$0xf]
    %v232 = vld [vmem:[#allocation7 + $0x90] sm:$0xf]
    %v233 = vld [vmem:[#allocation7 + $0x94] sm:$0xf]
    %v234 = vld [vmem:[#allocation7 + $0x98] sm:$0xf]
    %v235 = vld [vmem:[#allocation7 + $0x9c] sm:$0xf]
    %v236 = vld [vmem:[#allocation7 + $0xa0] sm:$0xf]
    %v237 = vld [vmem:[#allocation7 + $0xa4] sm:$0xf]
    %v238 = vld [vmem:[#allocation7 + $0xa8] sm:$0xf]
    %v239 = vld [vmem:[#allocation7 + $0xac] sm:$0xf]
    %v240 = vld [vmem:[#allocation7 + $0xb0] sm:$0xf]
    %v241 = vld [vmem:[#allocation7 + $0xb4] sm:$0xf]
    %v242 = vld [vmem:[#allocation7 + $0xb8] sm:$0xf]
    %v243 = vld [vmem:[#allocation7 + $0xbc] sm:$0xf]
    %v244 = vpack.c.bf16 %v227, %v227
    %v261 = vunpack.c.l.b16 %v228
    %v262 = vunpack.c.l.b16 %v229
    %v263 = vunpack.c.l.b16 %v230
    %v264 = vunpack.c.l.b16 %v231
    %v265 = vunpack.c.l.b16 %v232
    %v266 = vunpack.c.l.b16 %v233
    %v267 = vunpack.c.l.b16 %v234
    %v268 = vunpack.c.l.b16 %v235
    %v269 = vunpack.c.l.b16 %v236
    %v270 = vunpack.c.l.b16 %v237
    %v271 = vunpack.c.l.b16 %v238
    %v272 = vunpack.c.l.b16 %v239
    %v273 = vunpack.c.l.b16 %v240
    %v274 = vunpack.c.l.b16 %v241
    %v275 = vunpack.c.l.b16 %v242
    %v276 = vunpack.c.l.b16 %v243
    %v277 = vpack.c.b16 %v262, %v261
    %v278 = vpack.c.b16 %v264, %v263
    %v279 = vpack.c.b16 %v266, %v265
    %v280 = vpack.c.b16 %v268, %v267
    %v281 = vpack.c.b16 %v270, %v269
    %v282 = vpack.c.b16 %v272, %v271
    %v283 = vpack.c.b16 %v274, %v273
    %v284 = vpack.c.b16 %v276, %v275
    %293 = vmatprep.subr.bf16.mxu0 0
    %294 = vmatpush1.bf16.msra.mxu0 %v277
    %295 = vmatprep.subr.bf16.mxu0 0
    %296 = vmatpush1.bf16.msra.mxu0 %v278
    %297 = vmatprep.subr.bf16.mxu0 0
    %298 = vmatpush1.bf16.msra.mxu0 %v279
    %299 = vmatprep.subr.bf16.mxu0 0
    %300 = vmatpush1.bf16.msra.mxu0 %v280
    %301 = vmatprep.subr.bf16.mxu0 0
    %302 = vmatpush1.bf16.msra.mxu0 %v281
    %303 = vmatprep.subr.bf16.mxu0 0
    %304 = vmatpush1.bf16.msra.mxu0 %v282
    %305 = vmatprep.subr.bf16.mxu0 0
    %306 = vmatpush1.bf16.msra.mxu0 %v283
    %307 = vmatprep.subr.bf16.mxu0 0
    %308 = vmatpush1.bf16.msra.mxu0 %v284
    %309 = vmatprep.subr.bf16.mxu0 0
    %310 = vmatpush1.bf16.msra.mxu0 0
    %311 = vmatprep.subr.bf16.mxu0 0
    %312 = vmatpush1.bf16.msra.mxu0 0
    %313 = vmatprep.subr.bf16.mxu0 0
    %314 = vmatpush1.bf16.msra.mxu0 0
    %315 = vmatprep.subr.bf16.mxu0 0
    %316 = vmatpush1.bf16.msra.mxu0 0
    %317 = vmatprep.subr.bf16.mxu0 0
    %318 = vmatpush1.bf16.msra.mxu0 0
    %319 = vmatprep.subr.bf16.mxu0 0
    %320 = vmatpush1.bf16.msra.mxu0 0
    %321 = vmatprep.subr.bf16.mxu0 0
    %322 = vmatpush1.bf16.msra.mxu0 0
    %323 = vmatprep.subr.bf16.mxu0 0
    %324 = vmatpush1.bf16.msra.mxu0 0
    %325 = vmatprep.mubr.bf16.mxu0 0
    %326 = vmatmul.mubr.bf16.gmra.mrb[0].mxu0 %v244
    %v327 = vpop.f32.mrb[0].mxu0
    %v328 = vadd.f32 0.0, %v327
    %v329 = vpop.f32.mrb[0].mxu0
    %v330 = vpop.f32.mrb[0].mxu0
    %v331 = vpop.f32.mrb[0].mxu0
    %332 = vdwg.mxu0
    %v333 = vmul.f32 %v328, 0.5
    %v334 = vmul.f32 %v333, 1.442695
    %v335 = vpow.pop %v334
    %337 = vrot.lane.b32.xlu0 %v335, 112
    %v338 = vpop.permute.xlu0 %337
    %v340 = vmul.f32 %v58, %v338
    %v341 = vadd.f32 %v328, %v340
    %v342 = vld [vmem:[#allocation7 + $0xc0] sm:$0xf]
    %v343 = vld [vmem:[#allocation7 + $0xc4] sm:$0xf]
    %v344 = vpack.c.bf16 %v341, %v341
    %v345 = vld [vmem:[#allocation7 + $0xfc] sm:$0x8]
    %v346 = vunpack.c.l.bf16 %v345
    %v347 = vlaneseq
    %v348 = vshrl.u32 %v347, 7
    %v349 = vsub.s32 7, %v348
    %v350 = vrot.slane %v346, %v349
    %v353 = vunpack.c.l.b16 %v342
    %v354 = vunpack.c.l.b16 %v343
    %v355 = vpack.c.b16 %v354, %v353
    %vm357 = vcmask 130048
    %v359 = vsel %vm357, %v344, 0
    %361 = vmatprep.subr.bf16.mxu0 0
    %362 = vmatpush1.bf16.msra.mxu0 %v355
    %363 = vmatprep.subr.bf16.mxu0 0
    %364 = vmatpush1.bf16.msra.mxu0 0
    %365 = vmatprep.subr.bf16.mxu0 0
    %366 = vmatpush1.bf16.msra.mxu0 0
    %367 = vmatprep.subr.bf16.mxu0 0
    %368 = vmatpush1.bf16.msra.mxu0 0
    %369 = vmatprep.subr.bf16.mxu0 0
    %370 = vmatpush1.bf16.msra.mxu0 0
    %371 = vmatprep.subr.bf16.mxu0 0
    %372 = vmatpush1.bf16.msra.mxu0 0
    %373 = vmatprep.subr.bf16.mxu0 0
    %374 = vmatpush1.bf16.msra.mxu0 0
    %375 = vmatprep.subr.bf16.mxu0 0
    %376 = vmatpush1.bf16.msra.mxu0 0
    %377 = vmatprep.subr.bf16.mxu0 0
    %378 = vmatpush1.bf16.msra.mxu0 0
    %379 = vmatprep.subr.bf16.mxu0 0
    %380 = vmatpush1.bf16.msra.mxu0 0
    %381 = vmatprep.subr.bf16.mxu0 0
    %382 = vmatpush1.bf16.msra.mxu0 0
    %383 = vmatprep.subr.bf16.mxu0 0
    %384 = vmatpush1.bf16.msra.mxu0 0
    %385 = vmatprep.subr.bf16.mxu0 0
    %386 = vmatpush1.bf16.msra.mxu0 0
    %387 = vmatprep.subr.bf16.mxu0 0
    %388 = vmatpush1.bf16.msra.mxu0 0
    %389 = vmatprep.subr.bf16.mxu0 0
    %390 = vmatpush1.bf16.msra.mxu0 0
    %391 = vmatprep.subr.bf16.mxu0 0
    %392 = vmatpush1.bf16.msra.mxu0 0
    %393 = vmatprep.mubr.bf16.mxu0 0
    %394 = vmatmul.mubr.bf16.gmra.mrb[0].mxu0 %v359
    %v395 = vpop.f32.mrb[0].mxu0
    %v396 = vadd.f32 %v350, %v395
    %v397 = vpop.f32.mrb[0].mxu0
    %v398 = vpop.f32.mrb[0].mxu0
    %v399 = vpop.f32.mrb[0].mxu0
    %400 = vdwg.mxu0
    %v401 = vmax.f32 %v396, 0.0
    %v402 = vld [vmem:[#allocation7 + $0x100] sm:$0xf]
    %v403 = vld [vmem:[#allocation7 + $0x104] sm:$0xf]
    %v404 = vld [vmem:[#allocation7 + $0x108] sm:$0xf]
    %v405 = vld [vmem:[#allocation7 + $0x10c] sm:$0xf]
    %v406 = vld [vmem:[#allocation7 + $0x110] sm:$0xf]
    %v407 = vld [vmem:[#allocation7 + $0x114] sm:$0xf]
    %v408 = vld [vmem:[#allocation7 + $0x118] sm:$0xf]
    %v409 = vld [vmem:[#allocation7 + $0x11c] sm:$0xf]
    %v410 = vld [vmem:[#allocation7 + $0x120] sm:$0xf]
    %v411 = vld [vmem:[#allocation7 + $0x124] sm:$0xf]
    %v412 = vld [vmem:[#allocation7 + $0x128] sm:$0xf]
    %v413 = vld [vmem:[#allocation7 + $0x12c] sm:$0xf]
    %v414 = vld [vmem:[#allocation7 + $0x130] sm:$0xf]
    %v415 = vld [vmem:[#allocation7 + $0x134] sm:$0xf]
    %v416 = vld [vmem:[#allocation7 + $0x138] sm:$0xf]
    %v417 = vld [vmem:[#allocation7 + $0x13c] sm:$0xf]
    %v418 = vpack.c.bf16 %v401, %v401
    %v435 = vunpack.c.l.b16 %v402
    %v436 = vunpack.c.l.b16 %v403
    %v437 = vunpack.c.l.b16 %v404
    %v438 = vunpack.c.l.b16 %v405
    %v439 = vunpack.c.l.b16 %v406
    %v440 = vunpack.c.l.b16 %v407
    %v441 = vunpack.c.l.b16 %v408
    %v442 = vunpack.c.l.b16 %v409
    %v443 = vunpack.c.l.b16 %v410
    %v444 = vunpack.c.l.b16 %v411
    %v445 = vunpack.c.l.b16 %v412
    %v446 = vunpack.c.l.b16 %v413
    %v447 = vunpack.c.l.b16 %v414
    %v448 = vunpack.c.l.b16 %v415
    %v449 = vunpack.c.l.b16 %v416
    %v450 = vunpack.c.l.b16 %v417
    %v451 = vpack.c.b16 %v436, %v435
    %v452 = vpack.c.b16 %v438, %v437
    %v453 = vpack.c.b16 %v440, %v439
    %v454 = vpack.c.b16 %v442, %v441
    %v455 = vpack.c.b16 %v444, %v443
    %v456 = vpack.c.b16 %v446, %v445
    %v457 = vpack.c.b16 %v448, %v447
    %v458 = vpack.c.b16 %v450, %v449
    %467 = vmatprep.subr.bf16.mxu0 0
    %468 = vmatpush1.bf16.msra.mxu0 %v451
    %469 = vmatprep.subr.bf16.mxu0 0
    %470 = vmatpush1.bf16.msra.mxu0 %v452
    %471 = vmatprep.subr.bf16.mxu0 0
    %472 = vmatpush1.bf16.msra.mxu0 %v453
    %473 = vmatprep.subr.bf16.mxu0 0
    %474 = vmatpush1.bf16.msra.mxu0 %v454
    %475 = vmatprep.subr.bf16.mxu0 0
    %476 = vmatpush1.bf16.msra.mxu0 %v455
    %477 = vmatprep.subr.bf16.mxu0 0
    %478 = vmatpush1.bf16.msra.mxu0 %v456
    %479 = vmatprep.subr.bf16.mxu0 0
    %480 = vmatpush1.bf16.msra.mxu0 %v457
    %481 = vmatprep.subr.bf16.mxu0 0
    %482 = vmatpush1.bf16.msra.mxu0 %v458
    %483 = vmatprep.subr.bf16.mxu0 0
    %484 = vmatpush1.bf16.msra.mxu0 0
    %485 = vmatprep.subr.bf16.mxu0 0
    %486 = vmatpush1.bf16.msra.mxu0 0
    %487 = vmatprep.subr.bf16.mxu0 0
    %488 = vmatpush1.bf16.msra.mxu0 0
    %489 = vmatprep.subr.bf16.mxu0 0
    %490 = vmatpush1.bf16.msra.mxu0 0
    %491 = vmatprep.subr.bf16.mxu0 0
    %492 = vmatpush1.bf16.msra.mxu0 0
    %493 = vmatprep.subr.bf16.mxu0 0
    %494 = vmatpush1.bf16.msra.mxu0 0
    %495 = vmatprep.subr.bf16.mxu0 0
    %496 = vmatpush1.bf16.msra.mxu0 0
    %497 = vmatprep.subr.bf16.mxu0 0
    %498 = vmatpush1.bf16.msra.mxu0 0
    %499 = vmatprep.mubr.bf16.mxu0 0
    %500 = vmatmul.mubr.bf16.gmra.mrb[0].mxu0 %v418
    %v501 = vpop.f32.mrb[0].mxu0
    %v502 = vadd.f32 0.0, %v501
    %v503 = vpop.f32.mrb[0].mxu0
    %v504 = vpop.f32.mrb[0].mxu0
    %v505 = vpop.f32.mrb[0].mxu0
    %506 = vdwg.mxu0
    %v507 = vmax.f32 %v502, 0.0
    %v508 = vld [vmem:[#allocation7 + $0x140] sm:$0xf]
    %v509 = vld [vmem:[#allocation7 + $0x144] sm:$0xf]
    %v510 = vld [vmem:[#allocation7 + $0x148] sm:$0xf]
    %v511 = vld [vmem:[#allocation7 + $0x14c] sm:$0xf]
    %v512 = vld [vmem:[#allocation7 + $0x150] sm:$0xf]
    %v513 = vld [vmem:[#allocation7 + $0x154] sm:$0xf]
    %v514 = vld [vmem:[#allocation7 + $0x158] sm:$0xf]
    %v515 = vld [vmem:[#allocation7 + $0x15c] sm:$0xf]
    %v516 = vld [vmem:[#allocation7 + $0x160] sm:$0xf]
    %v517 = vld [vmem:[#allocation7 + $0x164] sm:$0xf]
    %v518 = vld [vmem:[#allocation7 + $0x168] sm:$0xf]
    %v519 = vld [vmem:[#allocation7 + $0x16c] sm:$0xf]
    %v520 = vld [vmem:[#allocation7 + $0x170] sm:$0xf]
    %v521 = vld [vmem:[#allocation7 + $0x174] sm:$0xf]
    %v522 = vld [vmem:[#allocation7 + $0x178] sm:$0xf]
    %v523 = vld [vmem:[#allocation7 + $0x17c] sm:$0xf]
    %v524 = vpack.c.bf16 %v507, %v507
    %v541 = vunpack.c.l.b16 %v508
    %v542 = vunpack.c.l.b16 %v509
    %v543 = vunpack.c.l.b16 %v510
    %v544 = vunpack.c.l.b16 %v511
    %v545 = vunpack.c.l.b16 %v512
    %v546 = vunpack.c.l.b16 %v513
    %v547 = vunpack.c.l.b16 %v514
    %v548 = vunpack.c.l.b16 %v515
    %v549 = vunpack.c.l.b16 %v516
    %v550 = vunpack.c.l.b16 %v517
    %v551 = vunpack.c.l.b16 %v518
    %v552 = vunpack.c.l.b16 %v519
    %v553 = vunpack.c.l.b16 %v520
    %v554 = vunpack.c.l.b16 %v521
    %v555 = vunpack.c.l.b16 %v522
    %v556 = vunpack.c.l.b16 %v523
    %v557 = vpack.c.b16 %v542, %v541
    %v558 = vpack.c.b16 %v544, %v543
    %v559 = vpack.c.b16 %v546, %v545
    %v560 = vpack.c.b16 %v548, %v547
    %v561 = vpack.c.b16 %v550, %v549
    %v562 = vpack.c.b16 %v552, %v551
    %v563 = vpack.c.b16 %v554, %v553
    %v564 = vpack.c.b16 %v556, %v555
    %573 = vmatprep.subr.bf16.mxu0 0
    %574 = vmatpush1.bf16.msra.mxu0 %v557
    %575 = vmatprep.subr.bf16.mxu0 0
    %576 = vmatpush1.bf16.msra.mxu0 %v558
    %577 = vmatprep.subr.bf16.mxu0 0
    %578 = vmatpush1.bf16.msra.mxu0 %v559
    %579 = vmatprep.subr.bf16.mxu0 0
    %580 = vmatpush1.bf16.msra.mxu0 %v560
    %581 = vmatprep.subr.bf16.mxu0 0
    %582 = vmatpush1.bf16.msra.mxu0 %v561
    %583 = vmatprep.subr.bf16.mxu0 0
    %584 = vmatpush1.bf16.msra.mxu0 %v562
    %585 = vmatprep.subr.bf16.mxu0 0
    %586 = vmatpush1.bf16.msra.mxu0 %v563
    %587 = vmatprep.subr.bf16.mxu0 0
    %588 = vmatpush1.bf16.msra.mxu0 %v564
    %589 = vmatprep.subr.bf16.mxu0 0
    %590 = vmatpush1.bf16.msra.mxu0 0
    %591 = vmatprep.subr.bf16.mxu0 0
    %592 = vmatpush1.bf16.msra.mxu0 0
    %593 = vmatprep.subr.bf16.mxu0 0
    %594 = vmatpush1.bf16.msra.mxu0 0
    %595 = vmatprep.subr.bf16.mxu0 0
    %596 = vmatpush1.bf16.msra.mxu0 0
    %597 = vmatprep.subr.bf16.mxu0 0
    %598 = vmatpush1.bf16.msra.mxu0 0
    %599 = vmatprep.subr.bf16.mxu0 0
    %600 = vmatpush1.bf16.msra.mxu0 0
    %601 = vmatprep.subr.bf16.mxu0 0
    %602 = vmatpush1.bf16.msra.mxu0 0
    %603 = vmatprep.subr.bf16.mxu0 0
    %604 = vmatpush1.bf16.msra.mxu0 0
    %605 = vmatprep.mubr.bf16.mxu0 0
    %606 = vmatmul.mubr.bf16.gmra.mrb[0].mxu0 %v524
    %v607 = vpop.f32.mrb[0].mxu0
    %v608 = vadd.f32 0.0, %v607
    %v609 = vpop.f32.mrb[0].mxu0
    %v610 = vpop.f32.mrb[0].mxu0
    %v611 = vpop.f32.mrb[0].mxu0
    %612 = vdwg.mxu0
    %613 = vst.msk [vmem:[#allocation8] sm:$0xff] %vm73, %v608
    %614 = vst.msk [vmem:[#allocation9] sm:$0xff] %vm357, %v328
    %616 = vrot.lane.b32.xlu0 %v328, 112
    %v617 = vpop.permute.xlu0 %616
    %619 = vst.msk [vmem:[#allocation11] sm:$0xff] %vm357, %v617
    // Predicated region
    $region26: #{vae_forward.1} parent=1 // pred_check
      _
    $region27: #{vae_forward.1} parent=1 // pred_check_branch
      %621 = sbr.rel (0) target = $region29
    $region28: #{vae_forward.1} parent=1 // pred_region
      %s623 = ssub.s32 128, 128
      %624 = vsyncadd [#allocation4], %s623
      %s626 = sshll.u32 [#allocation8], 4
      %s627 = int_to_ptr.vmem [resolvable:$true] %s626
      %629 = dma.vmem_to_hbm [thread:$0]  %s627, 128, %s3, [#allocation4]
    $region29: #{vae_forward.1} parent=1 // pred_fallthru
      _
    // Predicated region
    $region30: #{vae_forward.1} parent=1 // pred_check
      _
    $region31: #{vae_forward.1} parent=1 // pred_check_branch
      %631 = sbr.rel (0) target = $region33
    $region32: #{vae_forward.1} parent=1 // pred_region
      %s633 = ssub.s32 128, 128
      %634 = vsyncadd [#allocation10], %s633
      %s636 = sshll.u32 [#allocation9], 4
      %s637 = int_to_ptr.vmem [resolvable:$true] %s636
      %639 = dma.vmem_to_hbm [thread:$0]  %s637, 128, %s4, [#allocation10]
    $region33: #{vae_forward.1} parent=1 // pred_fallthru
      _
    // Predicated region
    $region34: #{vae_forward.1} parent=1 // pred_check
      _
    $region35: #{vae_forward.1} parent=1 // pred_check_branch
      %641 = sbr.rel (0) target = $region37
    $region36: #{vae_forward.1} parent=1 // pred_region
      %s643 = ssub.s32 128, 128
      %644 = vsyncadd [#allocation10], %s643
      %s646 = sshll.u32 [#allocation11], 4
      %s647 = int_to_ptr.vmem [resolvable:$true] %s646
      %649 = dma.vmem_to_hbm [thread:$0]  %s647, 128, %s5, [#allocation10]
    $region37: #{vae_forward.1} parent=1 // pred_fallthru
      _
    // Predicated region
    $region38: #{vae_forward.1} parent=1 // pred_check
      _
    $region39: #{vae_forward.1} parent=1 // pred_check_branch
      %651 = sbr.rel (0) target = $region41
    $region40: #{vae_forward.1} parent=1 // pred_region
      %652 = dma.done [#allocation4], 128
    $region41: #{vae_forward.1} parent=1 // pred_fallthru
      _
    // Predicated region
    $region42: #{vae_forward.1} parent=1 // pred_check
      _
    $region43: #{vae_forward.1} parent=1 // pred_check_branch
      %654 = sbr.rel (0) target = $region45
    $region44: #{vae_forward.1} parent=1 // pred_region
      %655 = dma.done [#allocation10], 128
    $region45: #{vae_forward.1} parent=1 // pred_fallthru
      _
    // Predicated region
    $region46: #{vae_forward.1} parent=1 // pred_check
      _
    $region47: #{vae_forward.1} parent=1 // pred_check_branch
      %657 = sbr.rel (0) target = $region49
    $region48: #{vae_forward.1} parent=1 // pred_region
      %658 = dma.done [#allocation10], 128
    $region49: #{vae_forward.1} parent=1 // pred_fallthru
      _
    %659 = vsyncpa [#allocation3], 1
    %660 = vsyncpa [#allocation6], 1
    %661 = vsyncpa [#allocation4], 1
    %662 = vsyncpa [#allocation10], 1

</llo_original>
